<compile_context>
chip_gen: v6e
topology: v6e:2x2x1
jax: 0.10.0
libtpu: 0.0.40
codegen_flags: <defaults>
</compile_context>

<pallas_src>
import functools

import jax
import jax.numpy as jnp
from jax.experimental import pallas as pl
from jax.experimental.pallas import tpu as pltpu
import numpy as np


def _round_up(x, m):
    return ((x + m - 1) // m) * m


def _cdiv(a, b):
    return -(-a // b)


def sine_layer_kernel(x_ref, w_ref, b_ref, gamma_ref, beta_ref, o_ref, *, omega):
    # x_ref:     (tm, in_p)   io_dtype
    # w_ref:     (in_p, tn)   io_dtype   (constant over batch axis)
    # b_ref:     (1,  tn)     f32
    # gamma_ref: (tm, tn)     io_dtype
    # beta_ref:  (tm, tn)     io_dtype
    # o_ref:     (tm, tn)     out_dtype
    z = jnp.dot(x_ref[...], w_ref[...], preferred_element_type=jnp.float32)
    z = z + b_ref[...]                       # linear bias (f32)
    z = z * gamma_ref[...].astype(jnp.float32) + beta_ref[...].astype(jnp.float32)
    o_ref[...] = jnp.sin(omega * z).astype(o_ref.dtype)


def sine_layer(x, w, b, gamma, beta, *, omega=30.0, tm=None, tn=None,
               io_dtype=None, out_dtype=None):
    """x: [B, in], w: [in, out], b: [out], gamma/beta: [B, out] -> [B, out]."""
    B, in_features = x.shape
    out_features = w.shape[1]

    # Only cast when the caller explicitly asks (casting here is an extra full
    # HBM pass; convert at the producer instead).
    io_dtype = np.dtype(x.dtype if io_dtype is None else io_dtype)
    out_dtype = np.dtype(x.dtype if out_dtype is None else out_dtype)

    # Lane-dense feature padding (only applied below when actually needed).
    in_p = _round_up(in_features, 128)
    out_p = _round_up(out_features, 128)

    # ---------------- tile selection & VMEM budget ----------------
    io_b = io_dtype.itemsize
    o_b = out_dtype.itemsize

    try:
        vmem_cap = int(pltpu.get_tpu_info().vmem_capacity_bytes)
    except Exception:
        vmem_cap = 64 * 1024 * 1024  # conservative (v7x-sized) fallback
    budget = max(12 << 20, min(int(0.45 * vmem_cap), 64 << 20))

    if tn is None:
        tn = min(512, out_p)
    tn = min(out_p, max(128, _round_up(int(tn), 128)))
    if tm is None:
        tm = min(2048, _round_up(B, 16))
    tm = max(16, _round_up(int(tm), 16))   # legal sublane tile for f32 & bf16

    def vmem_est(t_m, t_n):
        # x / gamma / beta / out double-buffered streams + (worst case
        # double-buffered) W and bias. Conservative: ignores Buffered(1) win.
        streams = 2 * t_m * (in_p * io_b + 2 * t_n * io_b + t_n * o_b)
        weights = 2 * (in_p * t_n * io_b + t_n * 4)
        return streams + weights

    while vmem_est(tm, tn) > budget:
        if tn > 128:                      # shrink W tile first: keeps tm large
            tn //= 2
        elif tm > 16:
            tm = max(16, _round_up(tm // 2, 16))
        else:
            break

    # Keep >= 2 grid steps when sensible so v7x's 2 TensorCores both get work.
    if _cdiv(B, tm) * _cdiv(out_p, tn) == 1 and B >= 32:
        tm = max(16, _round_up(_cdiv(B, 2), 16))

    nb = _cdiv(B, tm)          # batch dim NOT padded: trailing block is masked
    nn = _cdiv(out_p, tn)

    vmem_limit = int(min(0.9 * vmem_cap,
                         max(vmem_est(tm, tn) + (8 << 20), 32 << 20)))

    # ---------------- operand prep (no-op when already aligned) ----------------
    def prep2(a, rows_to, cols_to, dtype):
        if a.dtype != dtype:
            a = a.astype(dtype)
        pr, pc = rows_to - a.shape[0], cols_to - a.shape[1]
        if pr or pc:
            a = jnp.pad(a, ((0, pr), (0, pc)))
        return a

    x_p = prep2(x, B, in_p, io_dtype)
    w_p = prep2(w, in_p, out_p, io_dtype)
    g_p = prep2(gamma, B, out_p, io_dtype)
    bt_p = prep2(beta, B, out_p, io_dtype)
    b_p = b.astype(jnp.float32)
    if out_p != out_features:
        b_p = jnp.pad(b_p, (0, out_p - out_features))
    b_p = b_p.reshape(1, out_p)

    kernel = functools.partial(sine_layer_kernel, omega=float(omega))
    grid = (nb, nn)

    def build(single_buffer_weights):
        w_kwargs = {}
        if single_buffer_weights:
            # W / bias blocks only change along the (inner) out-feature axis;
            # single-buffering them halves their resident VMEM footprint.
            w_kwargs = dict(pipeline_mode=pl.Buffered(1))
        in_specs = [
            pl.BlockSpec((tm, in_p), lambda i, j: (i, 0)),              # x rows
            pl.BlockSpec((in_p, tn), lambda i, j: (0, j), **w_kwargs),  # W tile
            pl.BlockSpec((1, tn), lambda i, j: (0, j), **w_kwargs),     # bias
            pl.BlockSpec((tm, tn), lambda i, j: (i, j)),                # gamma
            pl.BlockSpec((tm, tn), lambda i, j: (i, j)),                # beta
        ]
        return pl.pallas_call(
            kernel,
            out_shape=jax.ShapeDtypeStruct((B, out_p), out_dtype),
            grid_spec=pltpu.PrefetchScalarGridSpec(
                num_scalar_prefetch=0,
                grid=grid,
                in_specs=in_specs,
                out_specs=pl.BlockSpec((tm, tn), lambda i, j: (i, j)),
            ),
            compiler_params=pltpu.CompilerParams(
                dimension_semantics=("parallel", "parallel"),
                vmem_limit_bytes=vmem_limit,
            ),
        )

    try:
        out = build(True)(x_p, w_p, b_p, g_p, bt_p)
    except Exception:
        # Fallback for JAX versions / lowerings that reject pipeline_mode.
        out = build(False)(x_p, w_p, b_p, g_p, bt_p)

    if out_p != out_features:
        out = out[:, :out_features]
    return out


def init_sine_layer_params(key, in_features, out_features, *,
                           is_first=False, omega=30.0):
    """Deterministic SIREN init, mirroring SineLayer.init_weights()."""
    kw, kb = jax.random.split(key)
    if is_first:
        bound_w = 1.0 / in_features
    else:
        bound_w = np.sqrt(6.0 / in_features) / omega
    # weight stored as [in_features, out_features] (transposed nn.Linear weight)
    w = jax.random.uniform(kw, (in_features, out_features), jnp.float32,
                           minval=-bound_w, maxval=bound_w)
    # nn.Linear default bias init: U(-1/sqrt(in), 1/sqrt(in))
    bound_b = 1.0 / np.sqrt(in_features)
    b = jax.random.uniform(kb, (out_features,), jnp.float32,
                           minval=-bound_b, maxval=bound_b)
    return w, b


if __name__ == "__main__":
    key = jax.random.PRNGKey(0)
    omega = 30.0

    def ref_fn(x, w, b, g, bt):
        return jnp.sin(omega * ((x @ w + b) * g + bt))

    # --- check 1: small f32 case, unaligned features (padding path), grid (1,1)
    k = jax.random.split(key, 4)
    B1, fin1, fout1 = 16, 32, 32
    w1, b1 = init_sine_layer_params(k[0], fin1, fout1, omega=omega)
    x1 = jax.random.normal(k[1], (B1, fin1), jnp.float32)
    g1 = jax.random.normal(k[2], (B1, fout1), jnp.float32)
    bt1 = jax.random.normal(k[3], (B1, fout1), jnp.float32)
    out1 = sine_layer(x1, w1, b1, g1, bt1, omega=omega)
    jax.block_until_ready(out1)
    np.testing.assert_allclose(np.asarray(out1),
                               np.asarray(ref_fn(x1, w1, b1, g1, bt1)),
                               rtol=1e-5, atol=1e-5)

    # --- check 2: ragged batch (partial trailing batch block, no row padding)
    k2 = jax.random.split(key, 8)
    B2, fin2, fout2 = 50, 24, 96
    w2, b2 = init_sine_layer_params(k2[0], fin2, fout2, omega=omega)
    x2 = jax.random.normal(k2[1], (B2, fin2), jnp.float32)
    g2 = jax.random.normal(k2[2], (B2, fout2), jnp.float32)
    bt2 = jax.random.normal(k2[3], (B2, fout2), jnp.float32)
    out2 = sine_layer(x2, w2, b2, g2, bt2, omega=omega)
    jax.block_until_ready(out2)
    np.testing.assert_allclose(np.asarray(out2),
                               np.asarray(ref_fn(x2, w2, b2, g2, bt2)),
                               rtol=1e-4, atol=1e-4)

    # --- check 3: 128-aligned features (zero wrapper pad/cast path), bf16 output
    k3 = jax.random.split(key, 12)
    B3, fin3, fout3 = 192, 128, 256
    w3, b3 = init_sine_layer_params(k3[0], fin3, fout3, omega=omega)
    x3 = jax.random.normal(k3[1], (B3, fin3), jnp.float32)
    g3 = jax.random.normal(k3[2], (B3, fout3), jnp.float32)
    bt3 = jax.random.normal(k3[3], (B3, fout3), jnp.float32)
    out3 = sine_layer(x3, w3, b3, g3, bt3, omega=omega, out_dtype=jnp.bfloat16)
    jax.block_until_ready(out3)
    np.testing.assert_allclose(np.asarray(out3).astype(np.float32),
                               np.asarray(ref_fn(x3, w3, b3, g3, bt3)),
                               rtol=2e-2, atol=2e-2)

    # --- check 4: explicit bf16 HBM I/O path (f32 accumulation / FiLM / sin)
    out4 = sine_layer(x2, w2, b2, g2, bt2, omega=omega, io_dtype=jnp.bfloat16)
    jax.block_until_ready(out4)
    z4 = jnp.dot(x2.astype(jnp.bfloat16), w2.astype(jnp.bfloat16),
                 preferred_element_type=jnp.float32) + b2
    ref4 = jnp.sin(omega * (z4 * g2.astype(jnp.bfloat16).astype(jnp.float32)
                            + bt2.astype(jnp.bfloat16).astype(jnp.float32)))
    np.testing.assert_allclose(np.asarray(out4), np.asarray(ref4),
                               rtol=1e-2, atol=1e-2)

    print("KERNEL_OK")
</pallas_src>

<mosaic_0001>
module attributes {stable_mosaic.version = 11 : i64} {
  func.func @sine_layer_kernel(%arg0: i32, %arg1: i32, %arg2: memref<16x128xf32, #tpu.memory_space<vmem>>, %arg3: memref<128x128xf32, #tpu.memory_space<vmem>>, %arg4: memref<1x128xf32, #tpu.memory_space<vmem>>, %arg5: memref<16x128xf32, #tpu.memory_space<vmem>>, %arg6: memref<16x128xf32, #tpu.memory_space<vmem>>, %arg7: memref<16x128xf32, #tpu.memory_space<vmem>>) attributes {dimension_semantics = [#tpu.dimension_semantics<parallel>, #tpu.dimension_semantics<parallel>], iteration_bounds = array<i64: 1, 1>, scalar_prefetch = 0 : i64, scratch_operands = 0 : i64, tpu.core_type = #tpu.core_type<tc>, window_params = [{transform_indices = @transform_0, window_bounds = array<i64: 16, 128>}, {pipeline_mode = #tpu.pipeline_mode<synchronous>, transform_indices = @transform_1, window_bounds = array<i64: 128, 128>}, {pipeline_mode = #tpu.pipeline_mode<synchronous>, transform_indices = @transform_2, window_bounds = array<i64: 1, 128>}, {transform_indices = @transform_3, window_bounds = array<i64: 16, 128>}, {transform_indices = @transform_4, window_bounds = array<i64: 16, 128>}, {transform_indices = @transform_5, window_bounds = array<i64: 16, 128>}]} {
    %c0 = arith.constant 0 : index
    %c0_0 = arith.constant 0 : index
    %0 = vector.load %arg2[%c0, %c0_0] : memref<16x128xf32, #tpu.memory_space<vmem>>, vector<16x128xf32>
    %c0_1 = arith.constant 0 : index
    %c0_2 = arith.constant 0 : index
    %1 = vector.load %arg3[%c0_1, %c0_2] : memref<128x128xf32, #tpu.memory_space<vmem>>, vector<128x128xf32>
    %cst = arith.constant dense<0.000000e+00> : vector<16x128xf32>
    %2 = tpu.matmul %0, %1, %cst {dimension_numbers = #tpu.dot_dimension_numbers<[1], [0], [0], [1], [0, 0, 1, 1], [], []>} : vector<16x128xf32>, vector<128x128xf32>, vector<16x128xf32> -> vector<16x128xf32>
    %c0_3 = arith.constant 0 : index
    %c0_4 = arith.constant 0 : index
    %3 = vector.load %arg4[%c0_3, %c0_4] : memref<1x128xf32, #tpu.memory_space<vmem>>, vector<1x128xf32>
    %4 = vector.broadcast %3 : vector<1x128xf32> to vector<16x128xf32>
    %5 = arith.addf %2, %4 : vector<16x128xf32>
    %c0_5 = arith.constant 0 : index
    %c0_6 = arith.constant 0 : index
    %6 = vector.load %arg5[%c0_5, %c0_6] : memref<16x128xf32, #tpu.memory_space<vmem>>, vector<16x128xf32>
    %7 = arith.mulf %5, %6 : vector<16x128xf32>
    %c0_7 = arith.constant 0 : index
    %c0_8 = arith.constant 0 : index
    %8 = vector.load %arg6[%c0_7, %c0_8] : memref<16x128xf32, #tpu.memory_space<vmem>>, vector<16x128xf32>
    %9 = arith.addf %7, %8 : vector<16x128xf32>
    %cst_9 = arith.constant 3.000000e+01 : f32
    %10 = vector.broadcast %cst_9 : f32 to vector<16x128xf32>
    %11 = arith.mulf %10, %9 : vector<16x128xf32>
    %12 = math.sin %11 : vector<16x128xf32>
    %c0_10 = arith.constant 0 : index
    %c0_11 = arith.constant 0 : index
    %13 = vector.load %arg7[%c0_10, %c0_11] : memref<16x128xf32, #tpu.memory_space<vmem>>, vector<16x128xf32>
    tpu.vector_store %arg7[%c0_10, %c0_11], %12 {strides = array<i32>} : memref<16x128xf32, #tpu.memory_space<vmem>>, vector<16x128xf32>,
    return
  }
  func.func @transform_0(%arg0: i32, %arg1: i32) -> (i32, i32) {
    %c0_i32 = arith.constant 0 : i32
    %c0_i32_0 = arith.constant 0 : i32
    return %arg0, %c0_i32 : i32, i32
  }
  func.func @transform_1(%arg0: i32, %arg1: i32) -> (i32, i32) {
    %c0_i32 = arith.constant 0 : i32
    %c0_i32_0 = arith.constant 0 : i32
    return %c0_i32, %arg1 : i32, i32
  }
  func.func @transform_2(%arg0: i32, %arg1: i32) -> (i32, i32) {
    %c0_i32 = arith.constant 0 : i32
    %c0_i32_0 = arith.constant 0 : i32
    return %c0_i32, %arg1 : i32, i32
  }
  func.func @transform_3(%arg0: i32, %arg1: i32) -> (i32, i32) {
    %c0_i32 = arith.constant 0 : i32
    return %arg0, %arg1 : i32, i32
  }
  func.func @transform_4(%arg0: i32, %arg1: i32) -> (i32, i32) {
    %c0_i32 = arith.constant 0 : i32
    return %arg0, %arg1 : i32, i32
  }
  func.func @transform_5(%arg0: i32, %arg1: i32) -> (i32, i32) {
    %c0_i32 = arith.constant 0 : i32
    return %arg0, %arg1 : i32, i32
  }
}

module attributes {stable_mosaic.version = 11 : i64} {
  func.func @sine_layer_kernel(%arg0: i32, %arg1: i32, %arg2: memref<16x128xf32, #tpu.memory_space<vmem>>, %arg3: memref<128x128xf32, #tpu.memory_space<vmem>>, %arg4: memref<1x128xf32, #tpu.memory_space<vmem>>, %arg5: memref<16x128xf32, #tpu.memory_space<vmem>>, %arg6: memref<16x128xf32, #tpu.memory_space<vmem>>, %arg7: memref<16x128xf32, #tpu.memory_space<vmem>>) attributes {dimension_semantics = [#tpu.dimension_semantics<parallel>, #tpu.dimension_semantics<parallel>], iteration_bounds = array<i64: 1, 1>, scalar_prefetch = 0 : i64, scratch_operands = 0 : i64, tpu.core_type = #tpu.core_type<tc>, window_params = [{transform_indices = @transform_0, window_bounds = array<i64: 16, 128>}, {transform_indices = @transform_1, window_bounds = array<i64: 128, 128>}, {transform_indices = @transform_2, window_bounds = array<i64: 1, 128>}, {transform_indices = @transform_3, window_bounds = array<i64: 16, 128>}, {transform_indices = @transform_4, window_bounds = array<i64: 16, 128>}, {transform_indices = @transform_5, window_bounds = array<i64: 16, 128>}]} {
    %c0 = arith.constant 0 : index
    %c0_0 = arith.constant 0 : index
    %0 = vector.load %arg2[%c0, %c0_0] : memref<16x128xf32, #tpu.memory_space<vmem>>, vector<16x128xf32>
    %c0_1 = arith.constant 0 : index
    %c0_2 = arith.constant 0 : index
    %1 = vector.load %arg3[%c0_1, %c0_2] : memref<128x128xf32, #tpu.memory_space<vmem>>, vector<128x128xf32>
    %cst = arith.constant dense<0.000000e+00> : vector<16x128xf32>
    %2 = tpu.matmul %0, %1, %cst {dimension_numbers = #tpu.dot_dimension_numbers<[1], [0], [0], [1], [0, 0, 1, 1], [], []>} : vector<16x128xf32>, vector<128x128xf32>, vector<16x128xf32> -> vector<16x128xf32>
    %c0_3 = arith.constant 0 : index
    %c0_4 = arith.constant 0 : index
    %3 = vector.load %arg4[%c0_3, %c0_4] : memref<1x128xf32, #tpu.memory_space<vmem>>, vector<1x128xf32>
    %4 = vector.broadcast %3 : vector<1x128xf32> to vector<16x128xf32>
    %5 = arith.addf %2, %4 : vector<16x128xf32>
    %c0_5 = arith.constant 0 : index
    %c0_6 = arith.constant 0 : index
    %6 = vector.load %arg5[%c0_5, %c0_6] : memref<16x128xf32, #tpu.memory_space<vmem>>, vector<16x128xf32>
    %7 = arith.mulf %5, %6 : vector<16x128xf32>
    %c0_7 = arith.constant 0 : index
    %c0_8 = arith.constant 0 : index
    %8 = vector.load %arg6[%c0_7, %c0_8] : memref<16x128xf32, #tpu.memory_space<vmem>>, vector<16x128xf32>
    %9 = arith.addf %7, %8 : vector<16x128xf32>
    %cst_9 = arith.constant 3.000000e+01 : f32
    %10 = vector.broadcast %cst_9 : f32 to vector<16x128xf32>
    %11 = arith.mulf %10, %9 : vector<16x128xf32>
    %12 = math.sin %11 : vector<16x128xf32>
    %c0_10 = arith.constant 0 : index
    %c0_11 = arith.constant 0 : index
    %13 = vector.load %arg7[%c0_10, %c0_11] : memref<16x128xf32, #tpu.memory_space<vmem>>, vector<16x128xf32>
    tpu.vector_store %arg7[%c0_10, %c0_11], %12 {strides = array<i32>} : memref<16x128xf32, #tpu.memory_space<vmem>>, vector<16x128xf32>,
    return
  }
  func.func @transform_0(%arg0: i32, %arg1: i32) -> (i32, i32) {
    %c0_i32 = arith.constant 0 : i32
    %c0_i32_0 = arith.constant 0 : i32
    return %arg0, %c0_i32 : i32, i32
  }
  func.func @transform_1(%arg0: i32, %arg1: i32) -> (i32, i32) {
    %c0_i32 = arith.constant 0 : i32
    %c0_i32_0 = arith.constant 0 : i32
    return %c0_i32, %arg1 : i32, i32
  }
  func.func @transform_2(%arg0: i32, %arg1: i32) -> (i32, i32) {
    %c0_i32 = arith.constant 0 : i32
    %c0_i32_0 = arith.constant 0 : i32
    return %c0_i32, %arg1 : i32, i32
  }
  func.func @transform_3(%arg0: i32, %arg1: i32) -> (i32, i32) {
    %c0_i32 = arith.constant 0 : i32
    return %arg0, %arg1 : i32, i32
  }
  func.func @transform_4(%arg0: i32, %arg1: i32) -> (i32, i32) {
    %c0_i32 = arith.constant 0 : i32
    return %arg0, %arg1 : i32, i32
  }
  func.func @transform_5(%arg0: i32, %arg1: i32) -> (i32, i32) {
    %c0_i32 = arith.constant 0 : i32
    return %arg0, %arg1 : i32, i32
  }
}

</mosaic_0001>

<llo_original>
// kernel: tpu_custom_call.1
$region0: #{tpu_custom_call.1}
  #allocation0 [shape = 'u32[]', space=smem, size = 0x4, offset = 0x4, fixed_abs, tag = 'smem constant byte address 0x4 - core index']
  #allocation1 [shape = 'u32[144,128]{1,0:T(1,128)}', space=vmem, size = 0x12000, scoped, tag = 'internal scratch']
  %s0 = inlined_call_operand.hbm [shape: f32[16,128], index: 0, kind: input, shape index: {}]
  %s1 = inlined_call_operand.hbm [shape: f32[128,128], index: 1, kind: input, shape index: {}]
  %s2 = inlined_call_operand.vmem [shape: f32[1,128], index: 2, kind: input, shape index: {}]
  %s3 = inlined_call_operand.hbm [shape: f32[16,128], index: 3, kind: input, shape index: {}]
  %s4 = inlined_call_operand.hbm [shape: f32[16,128], index: 4, kind: input, shape index: {}]
  %s5 = inlined_call_operand.hbm [shape: f32[16,128], index: 5, kind: output, shape index: {}]
  %s6 = sld [smem:[#allocation0]]
  $region46: #{tpu_custom_call.1} parent=0
    _
  %s8 = ssub.s32 1, %s6
  %s9 = scalar_select 0, %s8, %s6
  $region1: #{tpu_custom_call.1} parent=0
    #allocation2 [shape = 'u8[8192]{0}', space=vmem, size = 0x2000, scoped, tag = 'input window, operand 0, single buffered']
    #allocation3 [shape = 's32[1]{0}', space=sflag, size = 0x4, scoped, tag = 'scoped memory for tpu_custom_call.1']
    #allocation4 [shape = 's32[1]{0}', space=sflag, size = 0x4, scoped, tag = 'scoped memory for tpu_custom_call.1']
    #allocation5 [shape = 'u8[65536]{0}', space=vmem, size = 0x10000, scoped, tag = 'input window, operand 1, single buffered']
    #allocation6 [shape = 's32[1]{0}', space=sflag, size = 0x4, scoped, tag = 'scoped memory for tpu_custom_call.1']
    #allocation7 [shape = 'u8[8192]{0}', space=vmem, size = 0x2000, scoped, tag = 'input window, operand 3, single buffered']
    #allocation8 [shape = 'u8[8192]{0}', space=vmem, size = 0x2000, scoped, tag = 'input window, operand 4, single buffered']
    #allocation9 [shape = 's32[1]{0}', space=sflag, size = 0x4, scoped, tag = 'scoped memory for tpu_custom_call.1']
    #allocation10 [shape = 'u8[8192]{0}', space=vmem, size = 0x2000, scoped, tag = 'output window, operand 0, single buffered']
    %10 = vsyncpa [#allocation3], 0
    %11 = vsyncpa [#allocation6], 0
    %12 = vsyncpa [#allocation9], 0
    %13 = vsyncpa [#allocation4], 0
    // Predicated region
    $region2: #{tpu_custom_call.1} parent=1 // pred_check
      _
    $region3: #{tpu_custom_call.1} parent=1 // pred_check_branch
      %15 = sbr.rel (0) target = $region5
    $region4: #{tpu_custom_call.1} parent=1 // pred_region
      %s17 = ssub.s32 256, 256
      %18 = vsyncadd [#allocation3], %s17
      %s19 = sshll.u32 [#allocation2], 4
      %s20 = int_to_ptr.vmem [resolvable:$true] %s19
      %25 = dma.hbm_to_vmem [thread:$0]  %s0, 256, %s20, [#allocation3], 128, 128, 8
    $region5: #{tpu_custom_call.1} parent=1 // pred_fallthru
      _
    // Predicated region
    $region6: #{tpu_custom_call.1} parent=1 // pred_check
      _
    $region7: #{tpu_custom_call.1} parent=1 // pred_check_branch
      %27 = sbr.rel (0) target = $region9
    $region8: #{tpu_custom_call.1} parent=1 // pred_region
      %s29 = ssub.s32 2048, 2048
      %30 = vsyncadd [#allocation6], %s29
      %s31 = sshll.u32 [#allocation5], 4
      %s32 = int_to_ptr.vmem [resolvable:$true] %s31
      %37 = dma.hbm_to_vmem [thread:$0]  %s1, 2048, %s32, [#allocation6], 128, 128, 8
    $region9: #{tpu_custom_call.1} parent=1 // pred_fallthru
      _
    // Predicated region
    $region10: #{tpu_custom_call.1} parent=1 // pred_check
      _
    $region11: #{tpu_custom_call.1} parent=1 // pred_check_branch
      %39 = sbr.rel (0) target = $region13
    $region12: #{tpu_custom_call.1} parent=1 // pred_region
      _
    $region13: #{tpu_custom_call.1} parent=1 // pred_fallthru
      _
    // Predicated region
    $region14: #{tpu_custom_call.1} parent=1 // pred_check
      _
    $region15: #{tpu_custom_call.1} parent=1 // pred_check_branch
      %41 = sbr.rel (0) target = $region17
    $region16: #{tpu_custom_call.1} parent=1 // pred_region
      %s43 = ssub.s32 256, 256
      %44 = vsyncadd [#allocation6], %s43
      %s45 = sshll.u32 [#allocation7], 4
      %s46 = int_to_ptr.vmem [resolvable:$true] %s45
      %51 = dma.hbm_to_vmem [thread:$0]  %s3, 256, %s46, [#allocation6], 128, 128, 8
    $region17: #{tpu_custom_call.1} parent=1 // pred_fallthru
      _
    // Predicated region
    $region18: #{tpu_custom_call.1} parent=1 // pred_check
      _
    $region19: #{tpu_custom_call.1} parent=1 // pred_check_branch
      %53 = sbr.rel (0) target = $region21
    $region20: #{tpu_custom_call.1} parent=1 // pred_region
      %s55 = ssub.s32 256, 256
      %56 = vsyncadd [#allocation9], %s55
      %s57 = sshll.u32 [#allocation8], 4
      %s58 = int_to_ptr.vmem [resolvable:$true] %s57
      %63 = dma.hbm_to_vmem [thread:$0]  %s4, 256, %s58, [#allocation9], 128, 128, 8
    $region21: #{tpu_custom_call.1} parent=1 // pred_fallthru
      _
    // Predicated region
    $region22: #{tpu_custom_call.1} parent=1 // pred_check
      _
    $region23: #{tpu_custom_call.1} parent=1 // pred_check_branch
      %65 = sbr.rel (0) target = $region25
    $region24: #{tpu_custom_call.1} parent=1 // pred_region
      %66 = dma.done [#allocation3], 256
    $region25: #{tpu_custom_call.1} parent=1 // pred_fallthru
      _
    // Predicated region
    $region26: #{tpu_custom_call.1} parent=1 // pred_check
      _
    $region27: #{tpu_custom_call.1} parent=1 // pred_check_branch
      %68 = sbr.rel (0) target = $region29
    $region28: #{tpu_custom_call.1} parent=1 // pred_region
      %69 = dma.done [#allocation6], 2048
    $region29: #{tpu_custom_call.1} parent=1 // pred_fallthru
      _
    // Predicated region
    $region30: #{tpu_custom_call.1} parent=1 // pred_check
      _
    $region31: #{tpu_custom_call.1} parent=1 // pred_check_branch
      %71 = sbr.rel (0) target = $region33
    $region32: #{tpu_custom_call.1} parent=1 // pred_region
      %72 = dma.done [#allocation6], 256
    $region33: #{tpu_custom_call.1} parent=1 // pred_fallthru
      _
    // Predicated region
    $region34: #{tpu_custom_call.1} parent=1 // pred_check
      _
    $region35: #{tpu_custom_call.1} parent=1 // pred_check_branch
      %74 = sbr.rel (0) target = $region37
    $region36: #{tpu_custom_call.1} parent=1 // pred_region
      %75 = dma.done [#allocation9], 256
    $region37: #{tpu_custom_call.1} parent=1 // pred_fallthru
      _
    %v76 = vld [vmem:[#allocation2] sm:$0xff]
    %v77 = vld [vmem:[#allocation2 + $0x8] sm:$0xff]
    %v78 = vld [vmem:[#allocation5] sm:$0xff]
    %v79 = vld [vmem:[#allocation5 + $0x8] sm:$0xff]
    %v80 = vld [vmem:[#allocation5 + $0x10] sm:$0xff]
    %v81 = vld [vmem:[#allocation5 + $0x18] sm:$0xff]
    %v82 = vld [vmem:[#allocation5 + $0x20] sm:$0xff]
    %v83 = vld [vmem:[#allocation5 + $0x28] sm:$0xff]
    %v84 = vld [vmem:[#allocation5 + $0x30] sm:$0xff]
    %v85 = vld [vmem:[#allocation5 + $0x38] sm:$0xff]
    %v86 = vld [vmem:[#allocation5 + $0x40] sm:$0xff]
    %v87 = vld [vmem:[#allocation5 + $0x48] sm:$0xff]
    %v88 = vld [vmem:[#allocation5 + $0x50] sm:$0xff]
    %v89 = vld [vmem:[#allocation5 + $0x58] sm:$0xff]
    %v90 = vld [vmem:[#allocation5 + $0x60] sm:$0xff]
    %v91 = vld [vmem:[#allocation5 + $0x68] sm:$0xff]
    %v92 = vld [vmem:[#allocation5 + $0x70] sm:$0xff]
    %v93 = vld [vmem:[#allocation5 + $0x78] sm:$0xff]
    %v94 = vld [vmem:[%s2] sm:$0x1]
    %v96 = vlaneseq
    %v97 = vshrl.u32 %v96, 7
    %v98 = vsub.s32 0, %v97
    %v99 = vrot.slane %v94, %v98
    %101 = vmatprep.subr.mxu0 0.0
    %102 = vmatpush1.msra.mxu0 %v93
    %103 = vmatprep.subr.mxu0 0.0
    %104 = vmatpush1.msra.mxu0 %v92
    %105 = vmatprep.subr.mxu0 0.0
    %106 = vmatpush1.msra.mxu0 %v91
    %107 = vmatprep.subr.mxu0 0.0
    %108 = vmatpush1.msra.mxu0 %v90
    %109 = vmatprep.subr.mxu0 0.0
    %110 = vmatpush1.msra.mxu0 %v89
    %111 = vmatprep.subr.mxu0 0.0
    %112 = vmatpush1.msra.mxu0 %v88
    %113 = vmatprep.subr.mxu0 0.0
    %114 = vmatpush1.msra.mxu0 %v87
    %115 = vmatprep.subr.mxu0 0.0
    %116 = vmatpush1.msra.mxu0 %v86
    %117 = vmatprep.subr.mxu0 0.0
    %118 = vmatpush1.msra.mxu0 %v85
    %119 = vmatprep.subr.mxu0 0.0
    %120 = vmatpush1.msra.mxu0 %v84
    %121 = vmatprep.subr.mxu0 0.0
    %122 = vmatpush1.msra.mxu0 %v83
    %123 = vmatprep.subr.mxu0 0.0
    %124 = vmatpush1.msra.mxu0 %v82
    %125 = vmatprep.subr.mxu0 0.0
    %126 = vmatpush1.msra.mxu0 %v81
    %127 = vmatprep.subr.mxu0 0.0
    %128 = vmatpush1.msra.mxu0 %v80
    %129 = vmatprep.subr.mxu0 0.0
    %130 = vmatpush1.msra.mxu0 %v79
    %131 = vmatprep.subr.mxu0 0.0
    %132 = vmatpush1.msra.mxu0 %v78
    %133 = vmatprep.subr.mxu0 0.0
    %134 = vmatpush2.msra.mxu0 0.0
    %135 = vmatprep.subr.mxu0 0.0
    %136 = vmatpush2.msra.mxu0 0.0
    %137 = vmatprep.subr.mxu0 0.0
    %138 = vmatpush2.msra.mxu0 0.0
    %139 = vmatprep.subr.mxu0 0.0
    %140 = vmatpush2.msra.mxu0 0.0
    %141 = vmatprep.subr.mxu0 0.0
    %142 = vmatpush2.msra.mxu0 0.0
    %143 = vmatprep.subr.mxu0 0.0
    %144 = vmatpush2.msra.mxu0 0.0
    %145 = vmatprep.subr.mxu0 0.0
    %146 = vmatpush2.msra.mxu0 0.0
    %147 = vmatprep.subr.mxu0 0.0
    %148 = vmatpush2.msra.mxu0 0.0
    %149 = vmatprep.subr.mxu0 0.0
    %150 = vmatpush2.msra.mxu0 0.0
    %151 = vmatprep.subr.mxu0 0.0
    %152 = vmatpush2.msra.mxu0 0.0
    %153 = vmatprep.subr.mxu0 0.0
    %154 = vmatpush2.msra.mxu0 0.0
    %155 = vmatprep.subr.mxu0 0.0
    %156 = vmatpush2.msra.mxu0 0.0
    %157 = vmatprep.subr.mxu0 0.0
    %158 = vmatpush2.msra.mxu0 0.0
    %159 = vmatprep.subr.mxu0 0.0
    %160 = vmatpush2.msra.mxu0 0.0
    %161 = vmatprep.subr.mxu0 0.0
    %162 = vmatpush2.msra.mxu0 0.0
    %163 = vmatprep.subr.mxu0 0.0
    %164 = vmatpush2.msra.mxu0 0.0
    %165 = vmatprep.mubr.f32.mxu0 0.0
    %166 = vmatmul.mubr.f32.gmra.mxu0 %v76
    %v167 = vpop.f32.mrf.mxu0
    %v168 = vadd.f32 %v99, %v167
    %v169 = vpop.f32.mrf.mxu0
    %170 = vmatprep.mubr.f32.mxu0 0.0
    %171 = vmatmul.mubr.f32.gmra.mxu0 %v77
    %v172 = vpop.f32.mrf.mxu0
    %v173 = vadd.f32 %v99, %v172
    %v174 = vpop.f32.mrf.mxu0
    %175 = vdwg.mxu0
    %v176 = vld [vmem:[#allocation7] sm:$0xff]
    %v177 = vld [vmem:[#allocation7 + $0x8] sm:$0xff]
    %v178 = vmul.f32 %v168, %v176
    %v179 = vmul.f32 %v173, %v177
    %v180 = vld [vmem:[#allocation8] sm:$0xff]
    %v181 = vld [vmem:[#allocation8 + $0x8] sm:$0xff]
    %v182 = vadd.f32 %v178, %v180
    %v183 = vadd.f32 %v179, %v181
    %v184 = vmul.f32 %v182, 30.0
    %v185 = vmul.f32 %v183, 30.0
    %v186 = vand.u32 2147483647, %v184
    %vm187 = vcmp.le.f32.partialorder %v186, 0.7853982
    %vm188 = vcmp.lt.s32.totalorder %v184, 0
    %v189 = vand.u32 %v184, 2139095040
    %v190 = vshrl.u32 %v189, 23
    %v191 = vsub.s32 %v190, 127
    %v192 = vand.u32 2147483647, %v184
    %v193 = vand.u32 %v192, 8388607
    %v194 = vor.u32 %v193, 8388608
    %v195 = vsub.s32 0, %v194
    %v196 = vadd.s32 %v191, 1
    %vm197 = vcmp.gt.s32.totalorder %v196, 0
    %v198 = vsel %vm197, %v196, 0
    %v199 = vshrl.u32 %v198, 5
    %v200 = vand.u32 %v198, 31
    %v201 = vsub.s32 32, %v200
    %v202 = vshrl.u32 683565275, %v201
    %v203 = vshll.u32 683565275, %v200
    %v204 = vshrl.u32 2475754826, %v201
    %v205 = vor.u32 %v203, %v204
    %v206 = vshll.u32 2475754826, %v200
    %v207 = vshrl.u32 2131351028, %v201
    %v208 = vor.u32 %v206, %v207
    %v209 = vshll.u32 2131351028, %v200
    %v210 = vshrl.u32 2102212464, %v201
    %v211 = vor.u32 %v209, %v210
    %v212 = vshll.u32 2102212464, %v200
    %v213 = vshrl.u32 920167782, %v201
    %v214 = vor.u32 %v212, %v213
    %v215 = vshll.u32 920167782, %v200
    %v216 = vshrl.u32 1326507024, %v201
    %v217 = vor.u32 %v215, %v216
    %vm218 = vcmp.lt.s32.totalorder %v199, 1
    %vm219 = vcmp.lt.s32.totalorder %v199, 2
    %vm220 = vcmp.lt.s32.totalorder %v199, 3
    %vm221 = vcmp.lt.s32.totalorder %v199, 4
    %v222 = vsel %vm218, %v202, %v205
    %v223 = vsel %vm221, %v211, 2102212464
    %v224 = vsel %vm220, %v208, %v223
    %v225 = vsel %vm219, %v222, %v224
    %v226 = vsel %vm218, %v205, %v208
    %v227 = vsel %vm221, %v214, 920167782
    %v228 = vsel %vm220, %v211, %v227
    %v229 = vsel %vm219, %v226, %v228
    %v230 = vsel %vm218, %v208, %v211
    %v231 = vsel %vm221, %v217, 1326507024
    %v232 = vsel %vm220, %v214, %v231
    %v233 = vsel %vm219, %v230, %v232
    %v234 = vshll.u32 %v194, 8
    %v235 = vmul.u32.u64.compose %v234, %v233
    %v236 = vextract.low.u32 %v235
    %v237 = vextract.high.u32 %v235
    %v238 = vmul.u32.u64.compose %v234, %v229
    %v239 = vextract.low.u32 %v238
    %v240 = vextract.high.u32 %v238
    %v241 = vmul.u32 %v234, %v225
    %v242 = vadd.s32 %v237, %v239
    %vm243 = vc.u32 %v237, %v239
    %v244 = vadd.s32 %v240, 1
    %v245 = vsel %vm243, %v244, %v240
    %v246 = vadd.s32 %v241, %v245
    %v247 = vadd.s32 %v246, 536870912
    %v248 = vshrl.u32 %v247, 30
    %v249 = vshll.u32 %v248, 30
    %v250 = vsub.s32 %v246, %v249
    %vm251 = vcmp.lt.s32.totalorder %v250, 0
    %v252 = vsub.s32 0, %v250
    %v253 = vsel %vm251, %v252, %v250
    %v254 = vclz %v253
    %v255 = vsub.s32 %v254, 2
    %vm256 = vcmp.gt.s32.totalorder 0, %v255
    %v257 = vsel %vm256, 0, %v255
    %v258 = vsub.s32 32, %v257
    %v259 = vshll.u32 %v250, %v257
    %v260 = vshrl.u32 %v242, %v258
    %v261 = vor.u32 %v259, %v260
    %v262 = vsub.s32 4294967266, %v257
    %v263 = vadd.s32 %v262, 127
    %v264 = vshll.u32 %v263, 23
    %v265 = vor.u32 4788187, %v264
    %v266 = vand.u32 2147483647, %v265
    %v268 = vcvt.s32.f32 %v261
    %v269 = vmul.f32 %v268, %v266
    %v270 = vxor.u32 %v269, 2147483648
    %v271 = vsel %vm188, %v270, %v269
    %v272 = vsub.s32 4, %v248
    %v273 = vsel %vm188, %v272, %v248
    %v274 = vsel %vm187, %v184, %v271
    %v275 = vsel %vm187, 0, %v273
    %v276 = vcosq.f32.pop %v274
    %v277 = vsinq.f32.pop %v274
    %vm278 = vweird.f32 %v184
    %v279 = vadd.s32 %v275, 3
    %v280 = vand.u32 %v279, 3
    %vm281 = vcmp.lt.s32.totalorder %v280, 2
    %vm282 = vcmp.eq.s32.totalorder %v280, 0
    %v283 = vxor.u32 %v277, 2147483648
    %v284 = vsel %vm282, %v276, %v283
    %vm285 = vcmp.eq.s32.totalorder %v280, 2
    %v286 = vxor.u32 %v276, 2147483648
    %v287 = vsel %vm285, %v286, %v277
    %v288 = vsel %vm281, %v284, %v287
    %v289 = vsel %vm278, nan, %v288
    %v290 = vand.u32 2147483647, %v185
    %vm291 = vcmp.le.f32.partialorder %v290, 0.7853982
    %vm292 = vcmp.lt.s32.totalorder %v185, 0
    %v293 = vand.u32 %v185, 2139095040
    %v294 = vshrl.u32 %v293, 23
    %v295 = vsub.s32 %v294, 127
    %v296 = vand.u32 2147483647, %v185
    %v297 = vand.u32 %v296, 8388607
    %v298 = vor.u32 %v297, 8388608
    %v299 = vsub.s32 0, %v298
    %v300 = vadd.s32 %v295, 1
    %vm301 = vcmp.gt.s32.totalorder %v300, 0
    %v302 = vsel %vm301, %v300, 0
    %v303 = vshrl.u32 %v302, 5
    %v304 = vand.u32 %v302, 31
    %v305 = vsub.s32 32, %v304
    %v306 = vshrl.u32 683565275, %v305
    %v307 = vshll.u32 683565275, %v304
    %v308 = vshrl.u32 2475754826, %v305
    %v309 = vor.u32 %v307, %v308
    %v310 = vshll.u32 2475754826, %v304
    %v311 = vshrl.u32 2131351028, %v305
    %v312 = vor.u32 %v310, %v311
    %v313 = vshll.u32 2131351028, %v304
    %v314 = vshrl.u32 2102212464, %v305
    %v315 = vor.u32 %v313, %v314
    %v316 = vshll.u32 2102212464, %v304
    %v317 = vshrl.u32 920167782, %v305
    %v318 = vor.u32 %v316, %v317
    %v319 = vshll.u32 920167782, %v304
    %v320 = vshrl.u32 1326507024, %v305
    %v321 = vor.u32 %v319, %v320
    %vm322 = vcmp.lt.s32.totalorder %v303, 1
    %vm323 = vcmp.lt.s32.totalorder %v303, 2
    %vm324 = vcmp.lt.s32.totalorder %v303, 3
    %vm325 = vcmp.lt.s32.totalorder %v303, 4
    %v326 = vsel %vm322, %v306, %v309
    %v327 = vsel %vm325, %v315, 2102212464
    %v328 = vsel %vm324, %v312, %v327
    %v329 = vsel %vm323, %v326, %v328
    %v330 = vsel %vm322, %v309, %v312
    %v331 = vsel %vm325, %v318, 920167782
    %v332 = vsel %vm324, %v315, %v331
    %v333 = vsel %vm323, %v330, %v332
    %v334 = vsel %vm322, %v312, %v315
    %v335 = vsel %vm325, %v321, 1326507024
    %v336 = vsel %vm324, %v318, %v335
    %v337 = vsel %vm323, %v334, %v336
    %v338 = vshll.u32 %v298, 8
    %v339 = vmul.u32.u64.compose %v338, %v337
    %v340 = vextract.low.u32 %v339
    %v341 = vextract.high.u32 %v339
    %v342 = vmul.u32.u64.compose %v338, %v333
    %v343 = vextract.low.u32 %v342
    %v344 = vextract.high.u32 %v342
    %v345 = vmul.u32 %v338, %v329
    %v346 = vadd.s32 %v341, %v343
    %vm347 = vc.u32 %v341, %v343
    %v348 = vadd.s32 %v344, 1
    %v349 = vsel %vm347, %v348, %v344
    %v350 = vadd.s32 %v345, %v349
    %v351 = vadd.s32 %v350, 536870912
    %v352 = vshrl.u32 %v351, 30
    %v353 = vshll.u32 %v352, 30
    %v354 = vsub.s32 %v350, %v353
    %vm355 = vcmp.lt.s32.totalorder %v354, 0
    %v356 = vsub.s32 0, %v354
    %v357 = vsel %vm355, %v356, %v354
    %v358 = vclz %v357
    %v359 = vsub.s32 %v358, 2
    %vm360 = vcmp.gt.s32.totalorder 0, %v359
    %v361 = vsel %vm360, 0, %v359
    %v362 = vsub.s32 32, %v361
    %v363 = vshll.u32 %v354, %v361
    %v364 = vshrl.u32 %v346, %v362
    %v365 = vor.u32 %v363, %v364
    %v366 = vsub.s32 4294967266, %v361
    %v367 = vadd.s32 %v366, 127
    %v368 = vshll.u32 %v367, 23
    %v369 = vor.u32 4788187, %v368
    %v370 = vand.u32 2147483647, %v369
    %v372 = vcvt.s32.f32 %v365
    %v373 = vmul.f32 %v372, %v370
    %v374 = vxor.u32 %v373, 2147483648
    %v375 = vsel %vm292, %v374, %v373
    %v376 = vsub.s32 4, %v352
    %v377 = vsel %vm292, %v376, %v352
    %v378 = vsel %vm291, %v185, %v375
    %v379 = vsel %vm291, 0, %v377
    %v380 = vcosq.f32.pop %v378
    %v381 = vsinq.f32.pop %v378
    %vm382 = vweird.f32 %v185
    %v383 = vadd.s32 %v379, 3
    %v384 = vand.u32 %v383, 3
    %vm385 = vcmp.lt.s32.totalorder %v384, 2
    %vm386 = vcmp.eq.s32.totalorder %v384, 0
    %v387 = vxor.u32 %v381, 2147483648
    %v388 = vsel %vm386, %v380, %v387
    %vm389 = vcmp.eq.s32.totalorder %v384, 2
    %v390 = vxor.u32 %v380, 2147483648
    %v391 = vsel %vm389, %v390, %v381
    %v392 = vsel %vm385, %v388, %v391
    %v393 = vsel %vm382, nan, %v392
    %394 = vst [vmem:[#allocation10] sm:$0xff] %v289
    %395 = vst [vmem:[#allocation10 + $0x8] sm:$0xff] %v393
    // Predicated region
    $region38: #{tpu_custom_call.1} parent=1 // pred_check
      _
    $region39: #{tpu_custom_call.1} parent=1 // pred_check_branch
      %397 = sbr.rel (0) target = $region41
    $region40: #{tpu_custom_call.1} parent=1 // pred_region
      %s399 = ssub.s32 256, 256
      %400 = vsyncadd [#allocation4], %s399
      %s401 = sshll.u32 [#allocation10], 4
      %s402 = int_to_ptr.vmem [resolvable:$true] %s401
      %407 = dma.vmem_to_hbm [thread:$0]  %s402, 256, %s5, [#allocation4], 128, 128, 8
    $region41: #{tpu_custom_call.1} parent=1 // pred_fallthru
      _
    // Predicated region
    $region42: #{tpu_custom_call.1} parent=1 // pred_check
      _
    $region43: #{tpu_custom_call.1} parent=1 // pred_check_branch
      %409 = sbr.rel (0) target = $region45
    $region44: #{tpu_custom_call.1} parent=1 // pred_region
      %410 = dma.done [#allocation4], 256
    $region45: #{tpu_custom_call.1} parent=1 // pred_fallthru
      _
    %411 = vsyncpa [#allocation3], 1
    %412 = vsyncpa [#allocation6], 1
    %413 = vsyncpa [#allocation9], 1
    %414 = vsyncpa [#allocation4], 1

// kernel: tpu_custom_call.1
$region0: #{tpu_custom_call.1}
  #allocation0 [shape = 'u32[]', space=smem, size = 0x4, offset = 0x4, fixed_abs, tag = 'smem constant byte address 0x4 - core index']
  #allocation1 [shape = 'u32[144,128]{1,0:T(1,128)}', space=vmem, size = 0x12000, scoped, tag = 'internal scratch']
  %s0 = inlined_call_operand.hbm [shape: f32[16,128], index: 0, kind: input, shape index: {}]
  %s1 = inlined_call_operand.hbm [shape: f32[128,128], index: 1, kind: input, shape index: {}]
  %s2 = inlined_call_operand.vmem [shape: f32[1,128], index: 2, kind: input, shape index: {}]
  %s3 = inlined_call_operand.hbm [shape: f32[16,128], index: 3, kind: input, shape index: {}]
  %s4 = inlined_call_operand.hbm [shape: f32[16,128], index: 4, kind: input, shape index: {}]
  %s5 = inlined_call_operand.hbm [shape: f32[16,128], index: 5, kind: output, shape index: {}]
  %s6 = sld [smem:[#allocation0]]
  $region46: #{tpu_custom_call.1} parent=0
    _
  %s8 = ssub.s32 1, %s6
  %s9 = scalar_select 0, %s8, %s6
  $region1: #{tpu_custom_call.1} parent=0
    #allocation2 [shape = 'u8[8192]{0}', space=vmem, size = 0x2000, scoped, tag = 'input window, operand 0, single buffered']
    #allocation3 [shape = 's32[1]{0}', space=sflag, size = 0x4, scoped, tag = 'scoped memory for tpu_custom_call.1']
    #allocation4 [shape = 's32[1]{0}', space=sflag, size = 0x4, scoped, tag = 'scoped memory for tpu_custom_call.1']
    #allocation5 [shape = 'u8[65536]{0}', space=vmem, size = 0x10000, scoped, tag = 'input window, operand 1, single buffered']
    #allocation6 [shape = 's32[1]{0}', space=sflag, size = 0x4, scoped, tag = 'scoped memory for tpu_custom_call.1']
    #allocation7 [shape = 'u8[8192]{0}', space=vmem, size = 0x2000, scoped, tag = 'input window, operand 3, single buffered']
    #allocation8 [shape = 'u8[8192]{0}', space=vmem, size = 0x2000, scoped, tag = 'input window, operand 4, single buffered']
    #allocation9 [shape = 's32[1]{0}', space=sflag, size = 0x4, scoped, tag = 'scoped memory for tpu_custom_call.1']
    #allocation10 [shape = 'u8[8192]{0}', space=vmem, size = 0x2000, scoped, tag = 'output window, operand 0, single buffered']
    %10 = vsyncpa [#allocation3], 0
    %11 = vsyncpa [#allocation6], 0
    %12 = vsyncpa [#allocation9], 0
    %13 = vsyncpa [#allocation4], 0
    // Predicated region
    $region2: #{tpu_custom_call.1} parent=1 // pred_check
      _
    $region3: #{tpu_custom_call.1} parent=1 // pred_check_branch
      %15 = sbr.rel (0) target = $region5
    $region4: #{tpu_custom_call.1} parent=1 // pred_region
      %s17 = ssub.s32 256, 256
      %18 = vsyncadd [#allocation3], %s17
      %s19 = sshll.u32 [#allocation2], 4
      %s20 = int_to_ptr.vmem [resolvable:$true] %s19
      %25 = dma.hbm_to_vmem [thread:$0]  %s0, 256, %s20, [#allocation3], 128, 128, 8
    $region5: #{tpu_custom_call.1} parent=1 // pred_fallthru
      _
    // Predicated region
    $region6: #{tpu_custom_call.1} parent=1 // pred_check
      _
    $region7: #{tpu_custom_call.1} parent=1 // pred_check_branch
      %27 = sbr.rel (0) target = $region9
    $region8: #{tpu_custom_call.1} parent=1 // pred_region
      %s29 = ssub.s32 2048, 2048
      %30 = vsyncadd [#allocation6], %s29
      %s31 = sshll.u32 [#allocation5], 4
      %s32 = int_to_ptr.vmem [resolvable:$true] %s31
      %37 = dma.hbm_to_vmem [thread:$0]  %s1, 2048, %s32, [#allocation6], 128, 128, 8
    $region9: #{tpu_custom_call.1} parent=1 // pred_fallthru
      _
    // Predicated region
    $region10: #{tpu_custom_call.1} parent=1 // pred_check
      _
    $region11: #{tpu_custom_call.1} parent=1 // pred_check_branch
      %39 = sbr.rel (0) target = $region13
    $region12: #{tpu_custom_call.1} parent=1 // pred_region
      _
    $region13: #{tpu_custom_call.1} parent=1 // pred_fallthru
      _
    // Predicated region
    $region14: #{tpu_custom_call.1} parent=1 // pred_check
      _
    $region15: #{tpu_custom_call.1} parent=1 // pred_check_branch
      %41 = sbr.rel (0) target = $region17
    $region16: #{tpu_custom_call.1} parent=1 // pred_region
      %s43 = ssub.s32 256, 256
      %44 = vsyncadd [#allocation6], %s43
      %s45 = sshll.u32 [#allocation7], 4
      %s46 = int_to_ptr.vmem [resolvable:$true] %s45
      %51 = dma.hbm_to_vmem [thread:$0]  %s3, 256, %s46, [#allocation6], 128, 128, 8
    $region17: #{tpu_custom_call.1} parent=1 // pred_fallthru
      _
    // Predicated region
    $region18: #{tpu_custom_call.1} parent=1 // pred_check
      _
    $region19: #{tpu_custom_call.1} parent=1 // pred_check_branch
      %53 = sbr.rel (0) target = $region21
    $region20: #{tpu_custom_call.1} parent=1 // pred_region
      %s55 = ssub.s32 256, 256
      %56 = vsyncadd [#allocation9], %s55
      %s57 = sshll.u32 [#allocation8], 4
      %s58 = int_to_ptr.vmem [resolvable:$true] %s57
      %63 = dma.hbm_to_vmem [thread:$0]  %s4, 256, %s58, [#allocation9], 128, 128, 8
    $region21: #{tpu_custom_call.1} parent=1 // pred_fallthru
      _
    // Predicated region
    $region22: #{tpu_custom_call.1} parent=1 // pred_check
      _
    $region23: #{tpu_custom_call.1} parent=1 // pred_check_branch
      %65 = sbr.rel (0) target = $region25
    $region24: #{tpu_custom_call.1} parent=1 // pred_region
      %66 = dma.done [#allocation3], 256
    $region25: #{tpu_custom_call.1} parent=1 // pred_fallthru
      _
    // Predicated region
    $region26: #{tpu_custom_call.1} parent=1 // pred_check
      _
    $region27: #{tpu_custom_call.1} parent=1 // pred_check_branch
      %68 = sbr.rel (0) target = $region29
    $region28: #{tpu_custom_call.1} parent=1 // pred_region
      %69 = dma.done [#allocation6], 2048
    $region29: #{tpu_custom_call.1} parent=1 // pred_fallthru
      _
    // Predicated region
    $region30: #{tpu_custom_call.1} parent=1 // pred_check
      _
    $region31: #{tpu_custom_call.1} parent=1 // pred_check_branch
      %71 = sbr.rel (0) target = $region33
    $region32: #{tpu_custom_call.1} parent=1 // pred_region
      %72 = dma.done [#allocation6], 256
    $region33: #{tpu_custom_call.1} parent=1 // pred_fallthru
      _
    // Predicated region
    $region34: #{tpu_custom_call.1} parent=1 // pred_check
      _
    $region35: #{tpu_custom_call.1} parent=1 // pred_check_branch
      %74 = sbr.rel (0) target = $region37
    $region36: #{tpu_custom_call.1} parent=1 // pred_region
      %75 = dma.done [#allocation9], 256
    $region37: #{tpu_custom_call.1} parent=1 // pred_fallthru
      _
    %v76 = vld [vmem:[#allocation2] sm:$0xff]
    %v77 = vld [vmem:[#allocation2 + $0x8] sm:$0xff]
    %v78 = vld [vmem:[#allocation5] sm:$0xff]
    %v79 = vld [vmem:[#allocation5 + $0x8] sm:$0xff]
    %v80 = vld [vmem:[#allocation5 + $0x10] sm:$0xff]
    %v81 = vld [vmem:[#allocation5 + $0x18] sm:$0xff]
    %v82 = vld [vmem:[#allocation5 + $0x20] sm:$0xff]
    %v83 = vld [vmem:[#allocation5 + $0x28] sm:$0xff]
    %v84 = vld [vmem:[#allocation5 + $0x30] sm:$0xff]
    %v85 = vld [vmem:[#allocation5 + $0x38] sm:$0xff]
    %v86 = vld [vmem:[#allocation5 + $0x40] sm:$0xff]
    %v87 = vld [vmem:[#allocation5 + $0x48] sm:$0xff]
    %v88 = vld [vmem:[#allocation5 + $0x50] sm:$0xff]
    %v89 = vld [vmem:[#allocation5 + $0x58] sm:$0xff]
    %v90 = vld [vmem:[#allocation5 + $0x60] sm:$0xff]
    %v91 = vld [vmem:[#allocation5 + $0x68] sm:$0xff]
    %v92 = vld [vmem:[#allocation5 + $0x70] sm:$0xff]
    %v93 = vld [vmem:[#allocation5 + $0x78] sm:$0xff]
    %v94 = vld [vmem:[%s2] sm:$0x1]
    %v96 = vlaneseq
    %v97 = vshrl.u32 %v96, 7
    %v98 = vsub.s32 0, %v97
    %v99 = vrot.slane %v94, %v98
    %101 = vmatprep.subr.mxu0 0.0
    %102 = vmatpush1.msra.mxu0 %v93
    %103 = vmatprep.subr.mxu0 0.0
    %104 = vmatpush1.msra.mxu0 %v92
    %105 = vmatprep.subr.mxu0 0.0
    %106 = vmatpush1.msra.mxu0 %v91
    %107 = vmatprep.subr.mxu0 0.0
    %108 = vmatpush1.msra.mxu0 %v90
    %109 = vmatprep.subr.mxu0 0.0
    %110 = vmatpush1.msra.mxu0 %v89
    %111 = vmatprep.subr.mxu0 0.0
    %112 = vmatpush1.msra.mxu0 %v88
    %113 = vmatprep.subr.mxu0 0.0
    %114 = vmatpush1.msra.mxu0 %v87
    %115 = vmatprep.subr.mxu0 0.0
    %116 = vmatpush1.msra.mxu0 %v86
    %117 = vmatprep.subr.mxu0 0.0
    %118 = vmatpush1.msra.mxu0 %v85
    %119 = vmatprep.subr.mxu0 0.0
    %120 = vmatpush1.msra.mxu0 %v84
    %121 = vmatprep.subr.mxu0 0.0
    %122 = vmatpush1.msra.mxu0 %v83
    %123 = vmatprep.subr.mxu0 0.0
    %124 = vmatpush1.msra.mxu0 %v82
    %125 = vmatprep.subr.mxu0 0.0
    %126 = vmatpush1.msra.mxu0 %v81
    %127 = vmatprep.subr.mxu0 0.0
    %128 = vmatpush1.msra.mxu0 %v80
    %129 = vmatprep.subr.mxu0 0.0
    %130 = vmatpush1.msra.mxu0 %v79
    %131 = vmatprep.subr.mxu0 0.0
    %132 = vmatpush1.msra.mxu0 %v78
    %133 = vmatprep.subr.mxu0 0.0
    %134 = vmatpush2.msra.mxu0 0.0
    %135 = vmatprep.subr.mxu0 0.0
    %136 = vmatpush2.msra.mxu0 0.0
    %137 = vmatprep.subr.mxu0 0.0
    %138 = vmatpush2.msra.mxu0 0.0
    %139 = vmatprep.subr.mxu0 0.0
    %140 = vmatpush2.msra.mxu0 0.0
    %141 = vmatprep.subr.mxu0 0.0
    %142 = vmatpush2.msra.mxu0 0.0
    %143 = vmatprep.subr.mxu0 0.0
    %144 = vmatpush2.msra.mxu0 0.0
    %145 = vmatprep.subr.mxu0 0.0
    %146 = vmatpush2.msra.mxu0 0.0
    %147 = vmatprep.subr.mxu0 0.0
    %148 = vmatpush2.msra.mxu0 0.0
    %149 = vmatprep.subr.mxu0 0.0
    %150 = vmatpush2.msra.mxu0 0.0
    %151 = vmatprep.subr.mxu0 0.0
    %152 = vmatpush2.msra.mxu0 0.0
    %153 = vmatprep.subr.mxu0 0.0
    %154 = vmatpush2.msra.mxu0 0.0
    %155 = vmatprep.subr.mxu0 0.0
    %156 = vmatpush2.msra.mxu0 0.0
    %157 = vmatprep.subr.mxu0 0.0
    %158 = vmatpush2.msra.mxu0 0.0
    %159 = vmatprep.subr.mxu0 0.0
    %160 = vmatpush2.msra.mxu0 0.0
    %161 = vmatprep.subr.mxu0 0.0
    %162 = vmatpush2.msra.mxu0 0.0
    %163 = vmatprep.subr.mxu0 0.0
    %164 = vmatpush2.msra.mxu0 0.0
    %165 = vmatprep.mubr.f32.mxu0 0.0
    %166 = vmatmul.mubr.f32.gmra.mxu0 %v76
    %v167 = vpop.f32.mrf.mxu0
    %v168 = vadd.f32 %v99, %v167
    %v169 = vpop.f32.mrf.mxu0
    %170 = vmatprep.mubr.f32.mxu0 0.0
    %171 = vmatmul.mubr.f32.gmra.mxu0 %v77
    %v172 = vpop.f32.mrf.mxu0
    %v173 = vadd.f32 %v99, %v172
    %v174 = vpop.f32.mrf.mxu0
    %175 = vdwg.mxu0
    %v176 = vld [vmem:[#allocation7] sm:$0xff]
    %v177 = vld [vmem:[#allocation7 + $0x8] sm:$0xff]
    %v178 = vmul.f32 %v168, %v176
    %v179 = vmul.f32 %v173, %v177
    %v180 = vld [vmem:[#allocation8] sm:$0xff]
    %v181 = vld [vmem:[#allocation8 + $0x8] sm:$0xff]
    %v182 = vadd.f32 %v178, %v180
    %v183 = vadd.f32 %v179, %v181
    %v184 = vmul.f32 %v182, 30.0
    %v185 = vmul.f32 %v183, 30.0
    %v186 = vand.u32 2147483647, %v184
    %vm187 = vcmp.le.f32.partialorder %v186, 0.7853982
    %vm188 = vcmp.lt.s32.totalorder %v184, 0
    %v189 = vand.u32 %v184, 2139095040
    %v190 = vshrl.u32 %v189, 23
    %v191 = vsub.s32 %v190, 127
    %v192 = vand.u32 2147483647, %v184
    %v193 = vand.u32 %v192, 8388607
    %v194 = vor.u32 %v193, 8388608
    %v195 = vsub.s32 0, %v194
    %v196 = vadd.s32 %v191, 1
    %vm197 = vcmp.gt.s32.totalorder %v196, 0
    %v198 = vsel %vm197, %v196, 0
    %v199 = vshrl.u32 %v198, 5
    %v200 = vand.u32 %v198, 31
    %v201 = vsub.s32 32, %v200
    %v202 = vshrl.u32 683565275, %v201
    %v203 = vshll.u32 683565275, %v200
    %v204 = vshrl.u32 2475754826, %v201
    %v205 = vor.u32 %v203, %v204
    %v206 = vshll.u32 2475754826, %v200
    %v207 = vshrl.u32 2131351028, %v201
    %v208 = vor.u32 %v206, %v207
    %v209 = vshll.u32 2131351028, %v200
    %v210 = vshrl.u32 2102212464, %v201
    %v211 = vor.u32 %v209, %v210
    %v212 = vshll.u32 2102212464, %v200
    %v213 = vshrl.u32 920167782, %v201
    %v214 = vor.u32 %v212, %v213
    %v215 = vshll.u32 920167782, %v200
    %v216 = vshrl.u32 1326507024, %v201
    %v217 = vor.u32 %v215, %v216
    %vm218 = vcmp.lt.s32.totalorder %v199, 1
    %vm219 = vcmp.lt.s32.totalorder %v199, 2
    %vm220 = vcmp.lt.s32.totalorder %v199, 3
    %vm221 = vcmp.lt.s32.totalorder %v199, 4
    %v222 = vsel %vm218, %v202, %v205
    %v223 = vsel %vm221, %v211, 2102212464
    %v224 = vsel %vm220, %v208, %v223
    %v225 = vsel %vm219, %v222, %v224
    %v226 = vsel %vm218, %v205, %v208
    %v227 = vsel %vm221, %v214, 920167782
    %v228 = vsel %vm220, %v211, %v227
    %v229 = vsel %vm219, %v226, %v228
    %v230 = vsel %vm218, %v208, %v211
    %v231 = vsel %vm221, %v217, 1326507024
    %v232 = vsel %vm220, %v214, %v231
    %v233 = vsel %vm219, %v230, %v232
    %v234 = vshll.u32 %v194, 8
    %v235 = vmul.u32.u64.compose %v234, %v233
    %v236 = vextract.low.u32 %v235
    %v237 = vextract.high.u32 %v235
    %v238 = vmul.u32.u64.compose %v234, %v229
    %v239 = vextract.low.u32 %v238
    %v240 = vextract.high.u32 %v238
    %v241 = vmul.u32 %v234, %v225
    %v242 = vadd.s32 %v237, %v239
    %vm243 = vc.u32 %v237, %v239
    %v244 = vadd.s32 %v240, 1
    %v245 = vsel %vm243, %v244, %v240
    %v246 = vadd.s32 %v241, %v245
    %v247 = vadd.s32 %v246, 536870912
    %v248 = vshrl.u32 %v247, 30
    %v249 = vshll.u32 %v248, 30
    %v250 = vsub.s32 %v246, %v249
    %vm251 = vcmp.lt.s32.totalorder %v250, 0
    %v252 = vsub.s32 0, %v250
    %v253 = vsel %vm251, %v252, %v250
    %v254 = vclz %v253
    %v255 = vsub.s32 %v254, 2
    %vm256 = vcmp.gt.s32.totalorder 0, %v255
    %v257 = vsel %vm256, 0, %v255
    %v258 = vsub.s32 32, %v257
    %v259 = vshll.u32 %v250, %v257
    %v260 = vshrl.u32 %v242, %v258
    %v261 = vor.u32 %v259, %v260
    %v262 = vsub.s32 4294967266, %v257
    %v263 = vadd.s32 %v262, 127
    %v264 = vshll.u32 %v263, 23
    %v265 = vor.u32 4788187, %v264
    %v266 = vand.u32 2147483647, %v265
    %v268 = vcvt.s32.f32 %v261
    %v269 = vmul.f32 %v268, %v266
    %v270 = vxor.u32 %v269, 2147483648
    %v271 = vsel %vm188, %v270, %v269
    %v272 = vsub.s32 4, %v248
    %v273 = vsel %vm188, %v272, %v248
    %v274 = vsel %vm187, %v184, %v271
    %v275 = vsel %vm187, 0, %v273
    %v276 = vcosq.f32.pop %v274
    %v277 = vsinq.f32.pop %v274
    %vm278 = vweird.f32 %v184
    %v279 = vadd.s32 %v275, 3
    %v280 = vand.u32 %v279, 3
    %vm281 = vcmp.lt.s32.totalorder %v280, 2
    %vm282 = vcmp.eq.s32.totalorder %v280, 0
    %v283 = vxor.u32 %v277, 2147483648
    %v284 = vsel %vm282, %v276, %v283
    %vm285 = vcmp.eq.s32.totalorder %v280, 2
    %v286 = vxor.u32 %v276, 2147483648
    %v287 = vsel %vm285, %v286, %v277
    %v288 = vsel %vm281, %v284, %v287
    %v289 = vsel %vm278, nan, %v288
    %v290 = vand.u32 2147483647, %v185
    %vm291 = vcmp.le.f32.partialorder %v290, 0.7853982
    %vm292 = vcmp.lt.s32.totalorder %v185, 0
    %v293 = vand.u32 %v185, 2139095040
    %v294 = vshrl.u32 %v293, 23
    %v295 = vsub.s32 %v294, 127
    %v296 = vand.u32 2147483647, %v185
    %v297 = vand.u32 %v296, 8388607
    %v298 = vor.u32 %v297, 8388608
    %v299 = vsub.s32 0, %v298
    %v300 = vadd.s32 %v295, 1
    %vm301 = vcmp.gt.s32.totalorder %v300, 0
    %v302 = vsel %vm301, %v300, 0
    %v303 = vshrl.u32 %v302, 5
    %v304 = vand.u32 %v302, 31
    %v305 = vsub.s32 32, %v304
    %v306 = vshrl.u32 683565275, %v305
    %v307 = vshll.u32 683565275, %v304
    %v308 = vshrl.u32 2475754826, %v305
    %v309 = vor.u32 %v307, %v308
    %v310 = vshll.u32 2475754826, %v304
    %v311 = vshrl.u32 2131351028, %v305
    %v312 = vor.u32 %v310, %v311
    %v313 = vshll.u32 2131351028, %v304
    %v314 = vshrl.u32 2102212464, %v305
    %v315 = vor.u32 %v313, %v314
    %v316 = vshll.u32 2102212464, %v304
    %v317 = vshrl.u32 920167782, %v305
    %v318 = vor.u32 %v316, %v317
    %v319 = vshll.u32 920167782, %v304
    %v320 = vshrl.u32 1326507024, %v305
    %v321 = vor.u32 %v319, %v320
    %vm322 = vcmp.lt.s32.totalorder %v303, 1
    %vm323 = vcmp.lt.s32.totalorder %v303, 2
    %vm324 = vcmp.lt.s32.totalorder %v303, 3
    %vm325 = vcmp.lt.s32.totalorder %v303, 4
    %v326 = vsel %vm322, %v306, %v309
    %v327 = vsel %vm325, %v315, 2102212464
    %v328 = vsel %vm324, %v312, %v327
    %v329 = vsel %vm323, %v326, %v328
    %v330 = vsel %vm322, %v309, %v312
    %v331 = vsel %vm325, %v318, 920167782
    %v332 = vsel %vm324, %v315, %v331
    %v333 = vsel %vm323, %v330, %v332
    %v334 = vsel %vm322, %v312, %v315
    %v335 = vsel %vm325, %v321, 1326507024
    %v336 = vsel %vm324, %v318, %v335
    %v337 = vsel %vm323, %v334, %v336
    %v338 = vshll.u32 %v298, 8
    %v339 = vmul.u32.u64.compose %v338, %v337
    %v340 = vextract.low.u32 %v339
    %v341 = vextract.high.u32 %v339
    %v342 = vmul.u32.u64.compose %v338, %v333
    %v343 = vextract.low.u32 %v342
    %v344 = vextract.high.u32 %v342
    %v345 = vmul.u32 %v338, %v329
    %v346 = vadd.s32 %v341, %v343
    %vm347 = vc.u32 %v341, %v343
    %v348 = vadd.s32 %v344, 1
    %v349 = vsel %vm347, %v348, %v344
    %v350 = vadd.s32 %v345, %v349
    %v351 = vadd.s32 %v350, 536870912
    %v352 = vshrl.u32 %v351, 30
    %v353 = vshll.u32 %v352, 30
    %v354 = vsub.s32 %v350, %v353
    %vm355 = vcmp.lt.s32.totalorder %v354, 0
    %v356 = vsub.s32 0, %v354
    %v357 = vsel %vm355, %v356, %v354
    %v358 = vclz %v357
    %v359 = vsub.s32 %v358, 2
    %vm360 = vcmp.gt.s32.totalorder 0, %v359
    %v361 = vsel %vm360, 0, %v359
    %v362 = vsub.s32 32, %v361
    %v363 = vshll.u32 %v354, %v361
    %v364 = vshrl.u32 %v346, %v362
    %v365 = vor.u32 %v363, %v364
    %v366 = vsub.s32 4294967266, %v361
    %v367 = vadd.s32 %v366, 127
    %v368 = vshll.u32 %v367, 23
    %v369 = vor.u32 4788187, %v368
    %v370 = vand.u32 2147483647, %v369
    %v372 = vcvt.s32.f32 %v365
    %v373 = vmul.f32 %v372, %v370
    %v374 = vxor.u32 %v373, 2147483648
    %v375 = vsel %vm292, %v374, %v373
    %v376 = vsub.s32 4, %v352
    %v377 = vsel %vm292, %v376, %v352
    %v378 = vsel %vm291, %v185, %v375
    %v379 = vsel %vm291, 0, %v377
    %v380 = vcosq.f32.pop %v378
    %v381 = vsinq.f32.pop %v378
    %vm382 = vweird.f32 %v185
    %v383 = vadd.s32 %v379, 3
    %v384 = vand.u32 %v383, 3
    %vm385 = vcmp.lt.s32.totalorder %v384, 2
    %vm386 = vcmp.eq.s32.totalorder %v384, 0
    %v387 = vxor.u32 %v381, 2147483648
    %v388 = vsel %vm386, %v380, %v387
    %vm389 = vcmp.eq.s32.totalorder %v384, 2
    %v390 = vxor.u32 %v380, 2147483648
    %v391 = vsel %vm389, %v390, %v381
    %v392 = vsel %vm385, %v388, %v391
    %v393 = vsel %vm382, nan, %v392
    %394 = vst [vmem:[#allocation10] sm:$0xff] %v289
    %395 = vst [vmem:[#allocation10 + $0x8] sm:$0xff] %v393
    // Predicated region
    $region38: #{tpu_custom_call.1} parent=1 // pred_check
      _
    $region39: #{tpu_custom_call.1} parent=1 // pred_check_branch
      %397 = sbr.rel (0) target = $region41
    $region40: #{tpu_custom_call.1} parent=1 // pred_region
      %s399 = ssub.s32 256, 256
      %400 = vsyncadd [#allocation4], %s399
      %s401 = sshll.u32 [#allocation10], 4
      %s402 = int_to_ptr.vmem [resolvable:$true] %s401
      %407 = dma.vmem_to_hbm [thread:$0]  %s402, 256, %s5, [#allocation4], 128, 128, 8
    $region41: #{tpu_custom_call.1} parent=1 // pred_fallthru
      _
    // Predicated region
    $region42: #{tpu_custom_call.1} parent=1 // pred_check
      _
    $region43: #{tpu_custom_call.1} parent=1 // pred_check_branch
      %409 = sbr.rel (0) target = $region45
    $region44: #{tpu_custom_call.1} parent=1 // pred_region
      %410 = dma.done [#allocation4], 256
    $region45: #{tpu_custom_call.1} parent=1 // pred_fallthru
      _
    %411 = vsyncpa [#allocation3], 1
    %412 = vsyncpa [#allocation6], 1
    %413 = vsyncpa [#allocation9], 1
    %414 = vsyncpa [#allocation4], 1

</llo_original>
